<compile_context>
chip_gen: v7x
topology: tpu7x:2x2x1
jax: 0.10.0
libtpu: 0.0.40
codegen_flags: <defaults>
</compile_context>

<pallas_src>
import jax
import jax.numpy as jnp
from jax.experimental import pallas as pl
from jax.experimental.pallas import tpu as pltpu

MIN_A = -2.0
MAX_A = 2.0

LANE = 128          # TPU lane width
N = 16              # nodes per instance
F = 8               # input feature dim
H = 32              # hidden dim
G = 2               # graphs per instance
MLP1 = 64
MLP2 = 32

TB = 8              # instances per grid step -> TB*N == 128 stacked node rows (full MXU height)
SN = TB * N         # 128 stacked node rows per step
SG = TB * G         # 16 stacked graph rows per step
ROWS_P = ((SG + 7) // 8) * 8        # 16 (already sublane aligned)
OUT_ROWS = ROWS_P                    # lane-dense output block per step
ROWS_DATA = SN + SN + ROWS_P         # x rows + block-diag A_hat rows + block-diag P2 rows = 272

ROWS_W = 5 * LANE                    # 5 weight matrices, each zero-padded to 128x128
ROWS_WB = ROWS_W + 8                 # + 5 bias rows + lane-0 mask row + padding = 648


def _gnn_kernel(data_ref, w_ref, o_ref):
    f32 = jnp.float32
    bf16 = jnp.bfloat16

    x = data_ref[0:SN, :]                          # (128, 128) bf16, zero beyond F lanes
    a_hat = data_ref[SN:2 * SN, :]                 # (128, 128) block-diagonal A_hat
    p2 = data_ref[2 * SN:2 * SN + ROWS_P, :]       # (16, 128) block-diagonal pool @ A_hat

    w1 = w_ref[0 * LANE:1 * LANE, :]               # zero-padded (128, 128) bf16 blocks
    w2 = w_ref[1 * LANE:2 * LANE, :]
    fw1 = w_ref[2 * LANE:3 * LANE, :]
    fw2 = w_ref[3 * LANE:4 * LANE, :]
    fw3 = w_ref[4 * LANE:5 * LANE, :]

    b1 = w_ref[ROWS_W + 0:ROWS_W + 1, :].astype(f32)
    b2 = w_ref[ROWS_W + 1:ROWS_W + 2, :].astype(f32)
    fb1 = w_ref[ROWS_W + 2:ROWS_W + 3, :].astype(f32)
    fb2 = w_ref[ROWS_W + 3:ROWS_W + 4, :].astype(f32)
    fb3 = w_ref[ROWS_W + 4:ROWS_W + 5, :].astype(f32)
    col0 = w_ref[ROWS_W + 5:ROWS_W + 6, :].astype(f32)   # 1.0 at lane 0, 0.0 elsewhere

    # GCN layer 1: relu(A_hat @ (X @ W1) + b1) -- keep X@W1 first (cheaper association)
    h = jnp.dot(x, w1, preferred_element_type=f32)                          # (128, 128)
    h = jnp.dot(a_hat, h.astype(bf16), preferred_element_type=f32) + b1
    h = jnp.maximum(h, 0.0)

    # GCN layer 2 fused with global_mean_pool: (pool @ A_hat) @ (H @ W2) + b2
    h = jnp.dot(h.astype(bf16), w2, preferred_element_type=f32)             # (128, 128)
    g = jnp.dot(p2, h.astype(bf16), preferred_element_type=f32) + b2        # (16, 128)

    def lrelu(v):
        return jnp.where(v > 0, v, 0.1 * v)

    z = lrelu(jnp.dot(g.astype(bf16), fw1, preferred_element_type=f32) + fb1)
    z = lrelu(jnp.dot(z.astype(bf16), fw2, preferred_element_type=f32) + fb2)
    p = jnp.dot(z.astype(bf16), fw3, preferred_element_type=f32) + fb3      # (16, 128), lanes 0:2 valid

    # out[:,0] = sigmoid(p[:,0]) * (max_a - min_a) + min_a ;  out[:,1:] = p[:,1:]
    a_col = jax.nn.sigmoid(p) * (MAX_A - MIN_A) + MIN_A
    o_ref[...] = p + col0 * (a_col - p)                                     # lane-dense store


def _pack_weights(params):
    w1, b1, w2, b2, fw1, fb1, fw2, fb2, fw3, fb3 = params

    def pad_w(w):
        r, c = w.shape
        return jnp.pad(w.astype(jnp.float32), ((0, LANE - r), (0, LANE - c)))

    def pad_b(b):
        b = b.reshape(1, -1).astype(jnp.float32)
        return jnp.pad(b, ((0, 0), (0, LANE - b.shape[1])))

    col0 = jnp.zeros((1, LANE), jnp.float32).at[0, 0].set(1.0)
    slab = jnp.concatenate(
        [pad_w(w1), pad_w(w2), pad_w(fw1), pad_w(fw2), pad_w(fw3),
         pad_b(b1), pad_b(b2), pad_b(fb1), pad_b(fb2), pad_b(fb3),
         col0, jnp.zeros((ROWS_WB - ROWS_W - 6, LANE), jnp.float32)], axis=0)   # (648, 128)
    return slab.astype(jnp.bfloat16)


def _pack_data(x_b, a_hat_b, pool_b):
    # Fuse mean-pool into aggregation 2: P2 = pool @ A_hat.  Requires non-empty
    # graphs (pool rows sum to 1) so that pool @ broadcast(b2) == b2.
    # TODO(synk): if empty graphs can occur, disable this fusion for those rows.
    B = x_b.shape[0]
    nb = B // TB
    p2_b = jnp.einsum("bgn,bnm->bgm", pool_b, a_hat_b)                       # (B, G, N)

    eye_tb = jnp.eye(TB, dtype=jnp.float32)
    a_r = a_hat_b.astype(jnp.float32).reshape(nb, TB, N, N)
    a_bd = jnp.einsum("bknm,kl->bknlm", a_r, eye_tb).reshape(nb, SN, SN)     # block-diagonal
    p_r = p2_b.astype(jnp.float32).reshape(nb, TB, G, N)
    p_bd = jnp.einsum("bkgn,kl->bkgln", p_r, eye_tb).reshape(nb, SG, SN)     # block-diagonal

    x_s = x_b.astype(jnp.float32).reshape(nb, SN, F)
    x_pad = jnp.pad(x_s, ((0, 0), (0, 0), (0, LANE - F)))
    a_pad = jnp.pad(a_bd, ((0, 0), (0, 0), (0, LANE - SN)))
    p_pad = jnp.pad(p_bd, ((0, 0), (0, ROWS_P - SG), (0, LANE - SN)))
    return jnp.concatenate([x_pad, a_pad, p_pad], axis=1).astype(jnp.bfloat16)   # (nb, 272, 128)


@jax.jit
def exec_gnn_forward(x_b, a_hat_b, pool_b, params):
    B = x_b.shape[0]
    assert x_b.shape == (B, N, F)
    assert a_hat_b.shape == (B, N, N)
    assert pool_b.shape == (B, G, N)

    b_pad = ((B + TB - 1) // TB) * TB
    if b_pad != B:
        pad = b_pad - B
        x_b = jnp.pad(x_b, ((0, pad), (0, 0), (0, 0)))
        a_hat_b = jnp.pad(a_hat_b, ((0, pad), (0, 0), (0, 0)))
        pool_b = jnp.pad(pool_b, ((0, pad), (0, 0), (0, 0)))
    nb = b_pad // TB

    data = _pack_data(x_b, a_hat_b, pool_b)          # (nb, 272, 128) bf16
    w_slab = _pack_weights(params)                   # (648, 128) bf16

    flops_per_step = 2 * (3 * SN * LANE * LANE + 4 * ROWS_P * LANE * LANE)
    cost = pl.CostEstimate(
        flops=flops_per_step * nb,
        transcendentals=ROWS_P * LANE * nb,
        bytes_accessed=data.size * 2 + w_slab.size * 2 + nb * OUT_ROWS * LANE * 4,
    )

    grid_spec = pltpu.PrefetchScalarGridSpec(
        num_scalar_prefetch=0,
        grid=(nb,),
        in_specs=[
            pl.BlockSpec((pl.Squeezed(), ROWS_DATA, LANE), lambda b: (b, 0, 0)),
            pl.BlockSpec((ROWS_WB, LANE), lambda b: (0, 0)),   # VMEM-resident across the grid
        ],
        out_specs=pl.BlockSpec((pl.Squeezed(), OUT_ROWS, LANE), lambda b: (b, 0, 0)),
    )
    out = pl.pallas_call(
        _gnn_kernel,
        out_shape=jax.ShapeDtypeStruct((nb, OUT_ROWS, LANE), jnp.float32),
        grid_spec=grid_spec,
        compiler_params=pltpu.CompilerParams(
            dimension_semantics=("parallel",)),      # megacore sharding on v7x
        cost_estimate=cost,
    )(data, w_slab)
    return out.reshape(nb * TB, G, LANE)[:B, :, :2]


# ---------------- host-side helpers (graph construction, reference) ----------------

def xavier_uniform(key, shape):
    fan_in, fan_out = shape[0], shape[1]
    limit = jnp.sqrt(6.0 / (fan_in + fan_out))
    return jax.random.uniform(key, shape, jnp.float32, -limit, limit)


def build_normalized_adjacency(edge_index, num_nodes):
    # A_hat = D^{-1/2} (A + I) D^{-1/2}  (standard GCNConv normalization; dedupes duplicate edges)
    src, dst = edge_index[0], edge_index[1]
    adj = jnp.zeros((num_nodes, num_nodes), jnp.float32)
    adj = adj.at[src, dst].set(1.0)
    adj = adj.at[dst, src].set(1.0)
    adj = adj + jnp.eye(num_nodes, dtype=jnp.float32)
    deg = jnp.sum(adj, axis=1)
    d_inv_sqrt = 1.0 / jnp.sqrt(jnp.maximum(deg, 1e-12))
    return adj * d_inv_sqrt[:, None] * d_inv_sqrt[None, :]


def build_pool_matrix(batch, num_graphs):
    onehot = (batch[None, :] == jnp.arange(num_graphs)[:, None]).astype(jnp.float32)
    counts = jnp.maximum(jnp.sum(onehot, axis=1, keepdims=True), 1.0)
    return onehot / counts


def reference_forward_single(x, a_hat, pool, params):
    w1, b1, w2, b2, fw1, fb1, fw2, fb2, fw3, fb3 = params
    h = jnp.maximum(a_hat @ (x @ w1) + b1, 0.0)
    h = a_hat @ (h @ w2) + b2
    g = pool @ h
    lrelu = lambda v: jnp.where(v > 0, v, 0.1 * v)
    z = lrelu(g @ fw1 + fb1)
    z = lrelu(z @ fw2 + fb2)
    p = z @ fw3 + fb3
    a = jax.nn.sigmoid(p[:, 0]) * (MAX_A - MIN_A) + MIN_A
    return jnp.stack([a, p[:, 1]], axis=1)


if __name__ == "__main__":
    key = jax.random.PRNGKey(0)
    B = 16              # 2 grid steps of TB=8 instances -> both v7x TensorCores get work
    num_edges = 24

    keys = jax.random.split(key, 9)

    # shared parameters (GCNConv weights + MLP head)
    w1 = xavier_uniform(keys[0], (F, H))
    b1 = jnp.zeros((1, H), jnp.float32)
    w2 = xavier_uniform(keys[1], (H, H))
    b2 = jnp.zeros((1, H), jnp.float32)
    fw1 = xavier_uniform(keys[2], (H, MLP1))
    fb1 = 0.01 * jax.random.normal(keys[3], (1, MLP1), jnp.float32)
    fw2 = xavier_uniform(keys[4], (MLP1, MLP2))
    fb2 = 0.01 * jax.random.normal(keys[5], (1, MLP2), jnp.float32)
    fw3 = xavier_uniform(keys[6], (MLP2, 2))
    fb3 = 0.01 * jax.random.normal(keys[7], (1, 2), jnp.float32)
    params = (w1, b1, w2, b2, fw1, fb1, fw2, fb2, fw3, fb3)

    # B independent problem instances: N nodes, 2 graphs of N/2 nodes each
    batch = jnp.concatenate([jnp.zeros(N // 2, jnp.int32), jnp.ones(N // 2, jnp.int32)])
    xs, ahats, pools = [], [], []
    inst_keys = jax.random.split(keys[8], B)
    for i in range(B):
        k = jax.random.split(inst_keys[i], 3)
        xs.append(jax.random.normal(k[0], (N, F), jnp.float32))
        src = jax.random.randint(k[1], (num_edges,), 0, N)
        dst = jax.random.randint(k[2], (num_edges,), 0, N)
        edge_index = jnp.stack([src, dst], axis=0)
        ahats.append(build_normalized_adjacency(edge_index, N))
        pools.append(build_pool_matrix(batch, G))
    x_b = jnp.stack(xs)
    a_hat_b = jnp.stack(ahats)
    pool_b = jnp.stack(pools)

    out = exec_gnn_forward(x_b, a_hat_b, pool_b, params)
    out = jax.block_until_ready(out)

    assert out.shape == (B, G, 2)
    assert bool(jnp.all(jnp.isfinite(out)))
    # 'a' column must lie in (min_a, max_a)
    assert bool(jnp.all((out[:, :, 0] > MIN_A) & (out[:, :, 0] < MAX_A)))

    # verify the packed/fused bf16 kernel against a plain-f32 JAX reference of the module math
    # (tolerance loosened for bf16 MXU operands)
    ref = jnp.stack([reference_forward_single(x_b[i], a_hat_b[i], pool_b[i], params)
                     for i in range(B)])
    assert bool(jnp.allclose(out, ref, atol=7e-2, rtol=7e-2))

    print("KERNEL_OK")
</pallas_src>

<mosaic_0001>
module attributes {stable_mosaic.version = 11 : i64} {
  func.func @_gnn_kernel(%arg0: i32, %arg1: memref<1x272x128xbf16, #tpu.memory_space<vmem>>, %arg2: memref<648x128xbf16, #tpu.memory_space<vmem>>, %arg3: memref<1x16x128xf32, #tpu.memory_space<vmem>>) attributes {dimension_semantics = [#tpu.dimension_semantics<parallel>], iteration_bounds = array<i64: 2>, scalar_prefetch = 0 : i64, scratch_operands = 0 : i64, tpu.core_type = #tpu.core_type<tc>, window_params = [{transform_indices = @transform_0, window_bounds = array<i64: 1, 272, 128>}, {pipeline_mode = #tpu.pipeline_mode<synchronous>, transform_indices = @transform_1, window_bounds = array<i64: 648, 128>}, {transform_indices = @transform_2, window_bounds = array<i64: 1, 16, 128>}]} {
    %c0 = arith.constant 0 : index
    %c0_0 = arith.constant 0 : index
    %c0_1 = arith.constant 0 : index
    %0 = vector.load %arg1[%c0, %c0_0, %c0_1] : memref<1x272x128xbf16, #tpu.memory_space<vmem>>, vector<1x128x128xbf16>
    %1 = vector.shape_cast %0 : vector<1x128x128xbf16> to vector<128x128xbf16>
    %c0_2 = arith.constant 0 : index
    %c128 = arith.constant 128 : index
    %c0_3 = arith.constant 0 : index
    %2 = vector.load %arg1[%c0_2, %c128, %c0_3] : memref<1x272x128xbf16, #tpu.memory_space<vmem>>, vector<1x128x128xbf16>
    %3 = vector.shape_cast %2 : vector<1x128x128xbf16> to vector<128x128xbf16>
    %c0_4 = arith.constant 0 : index
    %c256 = arith.constant 256 : index
    %c0_5 = arith.constant 0 : index
    %4 = vector.load %arg1[%c0_4, %c256, %c0_5] : memref<1x272x128xbf16, #tpu.memory_space<vmem>>, vector<1x16x128xbf16>
    %5 = vector.shape_cast %4 : vector<1x16x128xbf16> to vector<16x128xbf16>
    %c0_6 = arith.constant 0 : index
    %c0_7 = arith.constant 0 : index
    %6 = vector.load %arg2[%c0_6, %c0_7] : memref<648x128xbf16, #tpu.memory_space<vmem>>, vector<128x128xbf16>
    %c128_8 = arith.constant 128 : index
    %c0_9 = arith.constant 0 : index
    %7 = vector.load %arg2[%c128_8, %c0_9] : memref<648x128xbf16, #tpu.memory_space<vmem>>, vector<128x128xbf16>
    %c256_10 = arith.constant 256 : index
    %c0_11 = arith.constant 0 : index
    %8 = vector.load %arg2[%c256_10, %c0_11] : memref<648x128xbf16, #tpu.memory_space<vmem>>, vector<128x128xbf16>
    %c384 = arith.constant 384 : index
    %c0_12 = arith.constant 0 : index
    %9 = vector.load %arg2[%c384, %c0_12] : memref<648x128xbf16, #tpu.memory_space<vmem>>, vector<128x128xbf16>
    %c512 = arith.constant 512 : index
    %c0_13 = arith.constant 0 : index
    %10 = vector.load %arg2[%c512, %c0_13] : memref<648x128xbf16, #tpu.memory_space<vmem>>, vector<128x128xbf16>
    %c640 = arith.constant 640 : index
    %c0_14 = arith.constant 0 : index
    %11 = vector.load %arg2[%c640, %c0_14] : memref<648x128xbf16, #tpu.memory_space<vmem>>, vector<1x128xbf16>
    %12 = arith.extf %11 : vector<1x128xbf16> to vector<1x128xf32>
    %c641 = arith.constant 641 : index
    %c0_15 = arith.constant 0 : index
    %13 = vector.load %arg2[%c641, %c0_15] : memref<648x128xbf16, #tpu.memory_space<vmem>>, vector<1x128xbf16>
    %14 = arith.extf %13 : vector<1x128xbf16> to vector<1x128xf32>
    %c642 = arith.constant 642 : index
    %c0_16 = arith.constant 0 : index
    %15 = vector.load %arg2[%c642, %c0_16] : memref<648x128xbf16, #tpu.memory_space<vmem>>, vector<1x128xbf16>
    %16 = arith.extf %15 : vector<1x128xbf16> to vector<1x128xf32>
    %c643 = arith.constant 643 : index
    %c0_17 = arith.constant 0 : index
    %17 = vector.load %arg2[%c643, %c0_17] : memref<648x128xbf16, #tpu.memory_space<vmem>>, vector<1x128xbf16>
    %18 = arith.extf %17 : vector<1x128xbf16> to vector<1x128xf32>
    %c644 = arith.constant 644 : index
    %c0_18 = arith.constant 0 : index
    %19 = vector.load %arg2[%c644, %c0_18] : memref<648x128xbf16, #tpu.memory_space<vmem>>, vector<1x128xbf16>
    %20 = arith.extf %19 : vector<1x128xbf16> to vector<1x128xf32>
    %c645 = arith.constant 645 : index
    %c0_19 = arith.constant 0 : index
    %21 = vector.load %arg2[%c645, %c0_19] : memref<648x128xbf16, #tpu.memory_space<vmem>>, vector<1x128xbf16>
    %22 = arith.extf %21 : vector<1x128xbf16> to vector<1x128xf32>
    %cst = arith.constant dense<0.000000e+00> : vector<128x128xf32>
    %23 = tpu.matmul %1, %6, %cst {dimension_numbers = #tpu.dot_dimension_numbers<[1], [0], [0], [1], [0, 0, 1, 1], [], []>} : vector<128x128xbf16>, vector<128x128xbf16>, vector<128x128xf32> -> vector<128x128xf32>
    %24 = arith.truncf %23 : vector<128x128xf32> to vector<128x128xbf16>
    %cst_20 = arith.constant dense<0.000000e+00> : vector<128x128xf32>
    %25 = tpu.matmul %3, %24, %cst_20 {dimension_numbers = #tpu.dot_dimension_numbers<[1], [0], [0], [1], [0, 0, 1, 1], [], []>} : vector<128x128xbf16>, vector<128x128xbf16>, vector<128x128xf32> -> vector<128x128xf32>
    %26 = vector.broadcast %12 : vector<1x128xf32> to vector<128x128xf32>
    %27 = arith.addf %25, %26 : vector<128x128xf32>
    %cst_21 = arith.constant 0.000000e+00 : f32
    %28 = vector.broadcast %cst_21 : f32 to vector<128x128xf32>
    %29 = arith.maximumf %27, %28 : vector<128x128xf32>
    %30 = arith.truncf %29 : vector<128x128xf32> to vector<128x128xbf16>
    %cst_22 = arith.constant dense<0.000000e+00> : vector<128x128xf32>
    %31 = tpu.matmul %30, %7, %cst_22 {dimension_numbers = #tpu.dot_dimension_numbers<[1], [0], [0], [1], [0, 0, 1, 1], [], []>} : vector<128x128xbf16>, vector<128x128xbf16>, vector<128x128xf32> -> vector<128x128xf32>
    %32 = arith.truncf %31 : vector<128x128xf32> to vector<128x128xbf16>
    %cst_23 = arith.constant dense<0.000000e+00> : vector<16x128xf32>
    %33 = tpu.matmul %5, %32, %cst_23 {dimension_numbers = #tpu.dot_dimension_numbers<[1], [0], [0], [1], [0, 0, 1, 1], [], []>} : vector<16x128xbf16>, vector<128x128xbf16>, vector<16x128xf32> -> vector<16x128xf32>
    %34 = vector.broadcast %14 : vector<1x128xf32> to vector<16x128xf32>
    %35 = arith.addf %33, %34 : vector<16x128xf32>
    %36 = arith.truncf %35 : vector<16x128xf32> to vector<16x128xbf16>
    %cst_24 = arith.constant dense<0.000000e+00> : vector<16x128xf32>
    %37 = tpu.matmul %36, %8, %cst_24 {dimension_numbers = #tpu.dot_dimension_numbers<[1], [0], [0], [1], [0, 0, 1, 1], [], []>} : vector<16x128xbf16>, vector<128x128xbf16>, vector<16x128xf32> -> vector<16x128xf32>
    %38 = vector.broadcast %16 : vector<1x128xf32> to vector<16x128xf32>
    %39 = arith.addf %37, %38 : vector<16x128xf32>
    %cst_25 = arith.constant 0.000000e+00 : f32
    %40 = vector.broadcast %cst_25 : f32 to vector<16x128xf32>
    %41 = arith.cmpf ogt, %39, %40 : vector<16x128xf32>
    %cst_26 = arith.constant 1.000000e-01 : f32
    %42 = vector.broadcast %cst_26 : f32 to vector<16x128xf32>
    %43 = arith.mulf %42, %39 : vector<16x128xf32>
    %44 = arith.select %41, %39, %43 : vector<16x128xi1>, vector<16x128xf32>
    %45 = arith.truncf %44 : vector<16x128xf32> to vector<16x128xbf16>
    %cst_27 = arith.constant dense<0.000000e+00> : vector<16x128xf32>
    %46 = tpu.matmul %45, %9, %cst_27 {dimension_numbers = #tpu.dot_dimension_numbers<[1], [0], [0], [1], [0, 0, 1, 1], [], []>} : vector<16x128xbf16>, vector<128x128xbf16>, vector<16x128xf32> -> vector<16x128xf32>
    %47 = vector.broadcast %18 : vector<1x128xf32> to vector<16x128xf32>
    %48 = arith.addf %46, %47 : vector<16x128xf32>
    %cst_28 = arith.constant 0.000000e+00 : f32
    %49 = vector.broadcast %cst_28 : f32 to vector<16x128xf32>
    %50 = arith.cmpf ogt, %48, %49 : vector<16x128xf32>
    %cst_29 = arith.constant 1.000000e-01 : f32
    %51 = vector.broadcast %cst_29 : f32 to vector<16x128xf32>
    %52 = arith.mulf %51, %48 : vector<16x128xf32>
    %53 = arith.select %50, %48, %52 : vector<16x128xi1>, vector<16x128xf32>
    %54 = arith.truncf %53 : vector<16x128xf32> to vector<16x128xbf16>
    %cst_30 = arith.constant dense<0.000000e+00> : vector<16x128xf32>
    %55 = tpu.matmul %54, %10, %cst_30 {dimension_numbers = #tpu.dot_dimension_numbers<[1], [0], [0], [1], [0, 0, 1, 1], [], []>} : vector<16x128xbf16>, vector<128x128xbf16>, vector<16x128xf32> -> vector<16x128xf32>
    %56 = vector.broadcast %20 : vector<1x128xf32> to vector<16x128xf32>
    %57 = arith.addf %55, %56 : vector<16x128xf32>
    %58 = arith.negf %57 : vector<16x128xf32>
    %59 = math.exp %58 : vector<16x128xf32>
    %cst_31 = arith.constant 1.000000e+00 : f32
    %60 = vector.broadcast %cst_31 : f32 to vector<16x128xf32>
    %61 = arith.addf %60, %59 : vector<16x128xf32>
    %62 = arith.divf %60, %61 : vector<16x128xf32>
    %cst_32 = arith.constant 4.000000e+00 : f32
    %63 = vector.broadcast %cst_32 : f32 to vector<16x128xf32>
    %64 = arith.mulf %62, %63 : vector<16x128xf32>
    %cst_33 = arith.constant -2.000000e+00 : f32
    %65 = vector.broadcast %cst_33 : f32 to vector<16x128xf32>
    %66 = arith.addf %64, %65 : vector<16x128xf32>
    %67 = arith.subf %66, %57 : vector<16x128xf32>
    %68 = vector.broadcast %22 : vector<1x128xf32> to vector<16x128xf32>
    %69 = arith.mulf %68, %67 : vector<16x128xf32>
    %70 = arith.addf %57, %69 : vector<16x128xf32>
    %c0_34 = arith.constant 0 : index
    %c0_35 = arith.constant 0 : index
    %c0_36 = arith.constant 0 : index
    %71 = vector.load %arg3[%c0_34, %c0_35, %c0_36] : memref<1x16x128xf32, #tpu.memory_space<vmem>>, vector<1x16x128xf32>
    %72 = vector.shape_cast %71 : vector<1x16x128xf32> to vector<16x128xf32>
    %73 = vector.shape_cast %70 : vector<16x128xf32> to vector<1x16x128xf32>
    tpu.vector_store %arg3[%c0_34, %c0_35, %c0_36], %73 {strides = array<i32>} : memref<1x16x128xf32, #tpu.memory_space<vmem>>, vector<1x16x128xf32>,
    return
  }
  func.func @transform_0(%arg0: i32) -> (i32, i32, i32) {
    %c0_i32 = arith.constant 0 : i32
    %c0_i32_0 = arith.constant 0 : i32
    %c0_i32_1 = arith.constant 0 : i32
    return %arg0, %c0_i32, %c0_i32_0 : i32, i32, i32
  }
  func.func @transform_1(%arg0: i32) -> (i32, i32) {
    %c0_i32 = arith.constant 0 : i32
    %c0_i32_0 = arith.constant 0 : i32
    %c0_i32_1 = arith.constant 0 : i32
    return %c0_i32, %c0_i32_0 : i32, i32
  }
  func.func @transform_2(%arg0: i32) -> (i32, i32, i32) {
    %c0_i32 = arith.constant 0 : i32
    %c0_i32_0 = arith.constant 0 : i32
    %c0_i32_1 = arith.constant 0 : i32
    return %arg0, %c0_i32, %c0_i32_0 : i32, i32, i32
  }
}

</mosaic_0001>

<llo_original>
// kernel: exec_gnn_forward.1
$region0: #{exec_gnn_forward.1}
  #allocation0 [shape = 'u32[]', space=smem, size = 0x4, offset = 0x4, fixed_abs, tag = 'smem constant byte address 0x4 - core index']
  #allocation1 [shape = 'u32[144,128]{1,0:T(1,128)}', space=vmem, size = 0x12000, scoped, tag = 'internal scratch']
  %s0 = inlined_call_operand.vmem [shape: bf16[2,272,128], index: 0, kind: input, shape index: {}]
  %s1 = inlined_call_operand.vmem [shape: bf16[648,128], index: 1, kind: input, shape index: {}]
  %s2 = inlined_call_operand.vmem [shape: f32[2,16,128], index: 2, kind: output, shape index: {}]
  %s3 = sld [smem:[#allocation0]]
  $region41: #{exec_gnn_forward.1} parent=0
    _
  %s5 = ssub.s32 1, %s3
  %s6 = scalar_select 0, %s5, %s3
  loop: start=0, step=1, limit=4
  $region2: #{exec_gnn_forward.1} parent=0 // loop_pre_header
    _
  $region3: #{exec_gnn_forward.1} parent=0 // loop_header
    %s8 = sphi 0, %s12
    %p9 = scmp.ge.s32.totalorder %s8, 4
    %s18 = sphi 0, %s20
    %s21 = sphi 0, %s18
    %s22 = sphi 0, %s21
    %s38 = sphi 0, %s22
    %s42 = sphi 0, %s42
    %s44 = sphi 0, %s42
    %s45 = sphi 0, %s44
    %s59 = sphi 0, %s45
    %s65 = sphi 0, %s67
    %s68 = sphi 0, %s65
    %s69 = sphi 0, %s68
    %s85 = sphi 0, %s69
  $region4: #{exec_gnn_forward.1} parent=0 // loop_header_branch
    %11 = sbr.rel (%p9) target = $region8
  $region5: #{exec_gnn_forward.1} parent=0 // loop_body
    %s13 = ssub.s32 %s8, 1
    %s14 = ssub.s32 %s8, 2
    %s15 = sadd.s32 %s8, 1
    %s16 = ssub.s32 %s8, %s15
    %p17 = scmp.eq.s32.totalorder %s16, 0
    %s19 = sadd.s32 %s18, 1
    %s20 = scalar_select %p17, %s18, %s19
    %p23 = pneg %p17
    %p24 = scmp.eq.s32.totalorder %s8, 1
    %p25 = por %p23, %p24
    %p26 = scmp.ne.s32.totalorder %s18, %s21
    %p27 = scmp.eq.s32.totalorder %s8, 0
    %p28 = por %p26, %p27
    %p29 = scmp.ne.s32.totalorder %s18, %s21
    %p30 = scmp.eq.s32.totalorder %s13, 1
    %p31 = por %p29, %p30
    %p32 = scmp.ne.s32.totalorder %s21, %s22
    %p33 = scmp.eq.s32.totalorder %s13, 0
    %p34 = por %p32, %p33
    %p35 = scmp.ne.s32.totalorder %s21, %s22
    %p36 = scmp.eq.s32.totalorder %s14, 1
    %p37 = por %p35, %p36
    %p39 = scmp.ne.s32.totalorder %s22, %s38
    %p40 = scmp.eq.s32.totalorder %s14, 0
    %p41 = por %p39, %p40
    %s43 = sadd.s32 %s42, 1
    %p46 = scmp.eq.s32.totalorder %s8, 1
    %p47 = scmp.ne.s32.totalorder %s42, %s44
    %p48 = scmp.eq.s32.totalorder %s8, 0
    %p49 = por %p47, %p48
    %p50 = scmp.ne.s32.totalorder %s42, %s44
    %p51 = scmp.eq.s32.totalorder %s13, 1
    %p52 = por %p50, %p51
    %p53 = scmp.ne.s32.totalorder %s44, %s45
    %p54 = scmp.eq.s32.totalorder %s13, 0
    %p55 = por %p53, %p54
    %p56 = scmp.ne.s32.totalorder %s44, %s45
    %p57 = scmp.eq.s32.totalorder %s14, 1
    %p58 = por %p56, %p57
    %p60 = scmp.ne.s32.totalorder %s45, %s59
    %p61 = scmp.eq.s32.totalorder %s14, 0
    %p62 = por %p60, %p61
    %s63 = ssub.s32 %s8, %s15
    %p64 = scmp.eq.s32.totalorder %s63, 0
    %s66 = sadd.s32 %s65, 1
    %s67 = scalar_select %p64, %s65, %s66
    %p70 = pneg %p64
    %p71 = scmp.eq.s32.totalorder %s8, 1
    %p72 = por %p70, %p71
    %p73 = scmp.ne.s32.totalorder %s65, %s68
    %p74 = scmp.eq.s32.totalorder %s8, 0
    %p75 = por %p73, %p74
    %p76 = scmp.ne.s32.totalorder %s65, %s68
    %p77 = scmp.eq.s32.totalorder %s13, 1
    %p78 = por %p76, %p77
    %p79 = scmp.ne.s32.totalorder %s68, %s69
    %p80 = scmp.eq.s32.totalorder %s13, 0
    %p81 = por %p79, %p80
    %p82 = scmp.ne.s32.totalorder %s68, %s69
    %p83 = scmp.eq.s32.totalorder %s14, 1
    %p84 = por %p82, %p83
    %p86 = scmp.ne.s32.totalorder %s69, %s85
    %p87 = scmp.eq.s32.totalorder %s14, 0
    %p88 = por %p86, %p87
    %p89 = scmp.le.s32.totalorder 1, %s8
    %p90 = scmp.lt.s32.totalorder %s8, 3
    %p91 = pnand %p89, %p90
    %p92 = pneg %p91
    // Predicated region
    $region9: #{exec_gnn_forward.1} parent=5 // pred_check
      _
    $region10: #{exec_gnn_forward.1} parent=5 // pred_check_branch
      %94 = sbr.rel (%p91) target = $region12
    $region11: #{exec_gnn_forward.1} parent=5 // pred_region
      %s95 = ssub.s32 %s8, 1
      // Predicated region
      $region13: #{exec_gnn_forward.1} parent=11 // pred_check
        %p96 = pneg %p55
      $region14: #{exec_gnn_forward.1} parent=11 // pred_check_branch
        %98 = sbr.rel (%p96) target = $region16
      $region15: #{exec_gnn_forward.1} parent=11 // pred_region
        _
      $region16: #{exec_gnn_forward.1} parent=11 // pred_fallthru
        _
    $region12: #{exec_gnn_forward.1} parent=5 // pred_fallthru
      _
    %p99 = scmp.lt.s32.totalorder %s8, 2
    // Predicated region
    $region17: #{exec_gnn_forward.1} parent=5 // pred_check
      %p100 = pneg %p99
    $region18: #{exec_gnn_forward.1} parent=5 // pred_check_branch
      %102 = sbr.rel (%p100) target = $region20
    $region19: #{exec_gnn_forward.1} parent=5 // pred_region
      // Predicated region
      $region21: #{exec_gnn_forward.1} parent=19 // pred_check
        %p103 = pneg %p28
      $region22: #{exec_gnn_forward.1} parent=19 // pred_check_branch
        %105 = sbr.rel (%p103) target = $region24
      $region23: #{exec_gnn_forward.1} parent=19 // pred_region
        %p106 = scmp.lt.s32.totalorder %s8, 1
        %s107 = scalar_select %p106, %s8, 1
        %s108 = smul.addr %s107, 34
        %s109 = smul.addr %s108, 4
        %s110 = scalar_lea.vmem %s0, %s109
      $region24: #{exec_gnn_forward.1} parent=19 // pred_fallthru
        _
    $region20: #{exec_gnn_forward.1} parent=5 // pred_fallthru
      _
    %p111 = scmp.le.s32.totalorder 1, %s8
    %p112 = scmp.lt.s32.totalorder %s8, 3
    %p113 = pnand %p111, %p112
    %p114 = pneg %p113
    // Predicated region
    $region25: #{exec_gnn_forward.1} parent=5 // pred_check
      _
    $region26: #{exec_gnn_forward.1} parent=5 // pred_check_branch
      %116 = sbr.rel (%p113) target = $region28
    $region27: #{exec_gnn_forward.1} parent=5 // pred_region
      %s117 = ssub.s32 %s8, 1
      %p118 = scmp.lt.s32.totalorder %s13, 1
      %s119 = scalar_select %p118, %s13, 1
      %s120 = smul.addr %s119, 34
      %s121 = smul.addr %s120, 4
      %s122 = scalar_lea.vmem %s0, %s121
      %p123 = pneg %p34
      %p124 = pneg %p31
      %p125 = pneg %p55
      %p126 = pneg %p52
      %p127 = pneg %p81
      %p128 = pneg %p78
      %p129 = scmp.lt.s32.totalorder %s13, 1
      %s130 = scalar_select %p129, %s13, 1
      %s131 = smul.addr %s130, 2
      %s132 = smul.addr %s131, 8
      %s133 = scalar_lea.vmem %s2, %s132
      %p134 = scmp.lt.s32.totalorder %s13, 1
      %s135 = scalar_select %p134, %s13, 1
      %s136 = smul.addr %s135, 34
      %s137 = smul.addr %s136, 4
      %s138 = scalar_lea.vmem %s0, %s137
      %p139 = scmp.lt.s32.totalorder %s13, 1
      %s140 = scalar_select %p139, %s13, 1
      %s141 = smul.addr %s140, 2
      %s142 = smul.addr %s141, 8
      %s143 = scalar_lea.vmem %s2, %s142
      %v145 = vld [vmem:[%s138] sm:$0xf]
      %v146 = vld [vmem:[%s138 + $0x4] sm:$0xf]
      %v147 = vld [vmem:[%s138 + $0x8] sm:$0xf]
      %v148 = vld [vmem:[%s138 + $0xc] sm:$0xf]
      %v149 = vld [vmem:[%s138 + $0x10] sm:$0xf]
      %v150 = vld [vmem:[%s138 + $0x14] sm:$0xf]
      %v151 = vld [vmem:[%s138 + $0x18] sm:$0xf]
      %v152 = vld [vmem:[%s138 + $0x1c] sm:$0xf]
      %v153 = vld [vmem:[%s138 + $0x20] sm:$0xf]
      %v154 = vld [vmem:[%s138 + $0x24] sm:$0xf]
      %v155 = vld [vmem:[%s138 + $0x28] sm:$0xf]
      %v156 = vld [vmem:[%s138 + $0x2c] sm:$0xf]
      %v157 = vld [vmem:[%s138 + $0x30] sm:$0xf]
      %v158 = vld [vmem:[%s138 + $0x34] sm:$0xf]
      %v159 = vld [vmem:[%s138 + $0x38] sm:$0xf]
      %v160 = vld [vmem:[%s138 + $0x3c] sm:$0xf]
      %v161 = vld [vmem:[%s138 + $0x40] sm:$0xf]
      %v162 = vld [vmem:[%s138 + $0x44] sm:$0xf]
      %v163 = vld [vmem:[%s138 + $0x48] sm:$0xf]
      %v164 = vld [vmem:[%s138 + $0x4c] sm:$0xf]
      %v165 = vld [vmem:[%s138 + $0x50] sm:$0xf]
      %v166 = vld [vmem:[%s138 + $0x54] sm:$0xf]
      %v167 = vld [vmem:[%s138 + $0x58] sm:$0xf]
      %v168 = vld [vmem:[%s138 + $0x5c] sm:$0xf]
      %v169 = vld [vmem:[%s138 + $0x60] sm:$0xf]
      %v170 = vld [vmem:[%s138 + $0x64] sm:$0xf]
      %v171 = vld [vmem:[%s138 + $0x68] sm:$0xf]
      %v172 = vld [vmem:[%s138 + $0x6c] sm:$0xf]
      %v173 = vld [vmem:[%s138 + $0x70] sm:$0xf]
      %v174 = vld [vmem:[%s138 + $0x74] sm:$0xf]
      %v175 = vld [vmem:[%s138 + $0x78] sm:$0xf]
      %v176 = vld [vmem:[%s138 + $0x7c] sm:$0xf]
      %v177 = vld [vmem:[%s138 + $0x80] sm:$0xf]
      %v178 = vld [vmem:[%s138 + $0x84] sm:$0xf]
      %v179 = vld [vmem:[%s1] sm:$0xf]
      %v180 = vld [vmem:[%s1 + $0x4] sm:$0xf]
      %v181 = vld [vmem:[%s1 + $0x8] sm:$0xf]
      %v182 = vld [vmem:[%s1 + $0xc] sm:$0xf]
      %v183 = vld [vmem:[%s1 + $0x10] sm:$0xf]
      %v184 = vld [vmem:[%s1 + $0x14] sm:$0xf]
      %v185 = vld [vmem:[%s1 + $0x18] sm:$0xf]
      %v186 = vld [vmem:[%s1 + $0x1c] sm:$0xf]
      %v187 = vld [vmem:[%s1 + $0x20] sm:$0xf]
      %v188 = vld [vmem:[%s1 + $0x24] sm:$0xf]
      %v189 = vld [vmem:[%s1 + $0x28] sm:$0xf]
      %v190 = vld [vmem:[%s1 + $0x2c] sm:$0xf]
      %v191 = vld [vmem:[%s1 + $0x30] sm:$0xf]
      %v192 = vld [vmem:[%s1 + $0x34] sm:$0xf]
      %v193 = vld [vmem:[%s1 + $0x38] sm:$0xf]
      %v194 = vld [vmem:[%s1 + $0x3c] sm:$0xf]
      %v195 = vld [vmem:[%s1 + $0x40] sm:$0xf]
      %v196 = vld [vmem:[%s1 + $0x44] sm:$0xf]
      %v197 = vld [vmem:[%s1 + $0x48] sm:$0xf]
      %v198 = vld [vmem:[%s1 + $0x4c] sm:$0xf]
      %v199 = vld [vmem:[%s1 + $0x50] sm:$0xf]
      %v200 = vld [vmem:[%s1 + $0x54] sm:$0xf]
      %v201 = vld [vmem:[%s1 + $0x58] sm:$0xf]
      %v202 = vld [vmem:[%s1 + $0x5c] sm:$0xf]
      %v203 = vld [vmem:[%s1 + $0x60] sm:$0xf]
      %v204 = vld [vmem:[%s1 + $0x64] sm:$0xf]
      %v205 = vld [vmem:[%s1 + $0x68] sm:$0xf]
      %v206 = vld [vmem:[%s1 + $0x6c] sm:$0xf]
      %v207 = vld [vmem:[%s1 + $0x70] sm:$0xf]
      %v208 = vld [vmem:[%s1 + $0x74] sm:$0xf]
      %v209 = vld [vmem:[%s1 + $0x78] sm:$0xf]
      %v210 = vld [vmem:[%s1 + $0x7c] sm:$0xf]
      %v211 = vld [vmem:[%s1 + $0x80] sm:$0xf]
      %v212 = vld [vmem:[%s1 + $0x84] sm:$0xf]
      %v213 = vld [vmem:[%s1 + $0x88] sm:$0xf]
      %v214 = vld [vmem:[%s1 + $0x8c] sm:$0xf]
      %v215 = vld [vmem:[%s1 + $0x90] sm:$0xf]
      %v216 = vld [vmem:[%s1 + $0x94] sm:$0xf]
      %v217 = vld [vmem:[%s1 + $0x98] sm:$0xf]
      %v218 = vld [vmem:[%s1 + $0x9c] sm:$0xf]
      %v219 = vld [vmem:[%s1 + $0xa0] sm:$0xf]
      %v220 = vld [vmem:[%s1 + $0xa4] sm:$0xf]
      %v221 = vld [vmem:[%s1 + $0xa8] sm:$0xf]
      %v222 = vld [vmem:[%s1 + $0xac] sm:$0xf]
      %v223 = vld [vmem:[%s1 + $0xb0] sm:$0xf]
      %v224 = vld [vmem:[%s1 + $0xb4] sm:$0xf]
      %v225 = vld [vmem:[%s1 + $0xb8] sm:$0xf]
      %v226 = vld [vmem:[%s1 + $0xbc] sm:$0xf]
      %v227 = vld [vmem:[%s1 + $0xc0] sm:$0xf]
      %v228 = vld [vmem:[%s1 + $0xc4] sm:$0xf]
      %v229 = vld [vmem:[%s1 + $0xc8] sm:$0xf]
      %v230 = vld [vmem:[%s1 + $0xcc] sm:$0xf]
      %v231 = vld [vmem:[%s1 + $0xd0] sm:$0xf]
      %v232 = vld [vmem:[%s1 + $0xd4] sm:$0xf]
      %v233 = vld [vmem:[%s1 + $0xd8] sm:$0xf]
      %v234 = vld [vmem:[%s1 + $0xdc] sm:$0xf]
      %v235 = vld [vmem:[%s1 + $0xe0] sm:$0xf]
      %v236 = vld [vmem:[%s1 + $0xe4] sm:$0xf]
      %v237 = vld [vmem:[%s1 + $0xe8] sm:$0xf]
      %v238 = vld [vmem:[%s1 + $0xec] sm:$0xf]
      %v239 = vld [vmem:[%s1 + $0xf0] sm:$0xf]
      %v240 = vld [vmem:[%s1 + $0xf4] sm:$0xf]
      %v241 = vld [vmem:[%s1 + $0xf8] sm:$0xf]
      %v242 = vld [vmem:[%s1 + $0xfc] sm:$0xf]
      %v243 = vld [vmem:[%s1 + $0x100] sm:$0xf]
      %v244 = vld [vmem:[%s1 + $0x104] sm:$0xf]
      %v245 = vld [vmem:[%s1 + $0x108] sm:$0xf]
      %v246 = vld [vmem:[%s1 + $0x10c] sm:$0xf]
      %v247 = vld [vmem:[%s1 + $0x110] sm:$0xf]
      %v248 = vld [vmem:[%s1 + $0x114] sm:$0xf]
      %v249 = vld [vmem:[%s1 + $0x118] sm:$0xf]
      %v250 = vld [vmem:[%s1 + $0x11c] sm:$0xf]
      %v251 = vld [vmem:[%s1 + $0x120] sm:$0xf]
      %v252 = vld [vmem:[%s1 + $0x124] sm:$0xf]
      %v253 = vld [vmem:[%s1 + $0x128] sm:$0xf]
      %v254 = vld [vmem:[%s1 + $0x12c] sm:$0xf]
      %v255 = vld [vmem:[%s1 + $0x130] sm:$0xf]
      %v256 = vld [vmem:[%s1 + $0x134] sm:$0xf]
      %v257 = vld [vmem:[%s1 + $0x138] sm:$0xf]
      %v258 = vld [vmem:[%s1 + $0x13c] sm:$0xf]
      %v259 = vld [vmem:[%s1 + $0x140] sm:$0x1]
      %v260 = vunpack.c.l.bf16 %v259
      %v261 = vld [vmem:[%s1 + $0x140] sm:$0x2]
      %v262 = vunpack.c.l.bf16 %v261
      %v263 = vld [vmem:[%s1 + $0x140] sm:$0x4]
      %v264 = vunpack.c.l.bf16 %v263
      %v281 = vunpack.c.l.b16 %v145
      %v282 = vunpack.c.l.b16 %v146
      %v283 = vunpack.c.l.b16 %v147
      %v284 = vunpack.c.l.b16 %v148
      %v285 = vunpack.c.l.b16 %v149
      %v286 = vunpack.c.l.b16 %v150
      %v287 = vunpack.c.l.b16 %v151
      %v288 = vunpack.c.l.b16 %v152
      %v289 = vunpack.c.l.b16 %v153
      %v290 = vunpack.c.l.b16 %v154
      %v291 = vunpack.c.l.b16 %v155
      %v292 = vunpack.c.l.b16 %v156
      %v293 = vunpack.c.l.b16 %v157
      %v294 = vunpack.c.l.b16 %v158
      %v295 = vunpack.c.l.b16 %v159
      %v296 = vunpack.c.l.b16 %v160
      %v297 = vpack.c.b16 %v282, %v281
      %v298 = vpack.c.b16 %v284, %v283
      %v299 = vpack.c.b16 %v286, %v285
      %v300 = vpack.c.b16 %v288, %v287
      %v301 = vpack.c.b16 %v290, %v289
      %v302 = vpack.c.b16 %v292, %v291
      %v303 = vpack.c.b16 %v294, %v293
      %v304 = vpack.c.b16 %v296, %v295
      %v329 = vunpack.c.l.b16 %v179
      %v330 = vunpack.c.l.b16 %v180
      %v331 = vunpack.c.l.b16 %v181
      %v332 = vunpack.c.l.b16 %v182
      %v333 = vunpack.c.l.b16 %v183
      %v334 = vunpack.c.l.b16 %v184
      %v335 = vunpack.c.l.b16 %v185
      %v336 = vunpack.c.l.b16 %v186
      %v337 = vunpack.c.l.b16 %v187
      %v338 = vunpack.c.l.b16 %v188
      %v339 = vunpack.c.l.b16 %v189
      %v340 = vunpack.c.l.b16 %v190
      %v341 = vunpack.c.l.b16 %v191
      %v342 = vunpack.c.l.b16 %v192
      %v343 = vunpack.c.l.b16 %v193
      %v344 = vunpack.c.l.b16 %v194
      %v345 = vpack.c.b16 %v330, %v329
      %v346 = vpack.c.b16 %v332, %v331
      %v347 = vpack.c.b16 %v334, %v333
      %v348 = vpack.c.b16 %v336, %v335
      %v349 = vpack.c.b16 %v338, %v337
      %v350 = vpack.c.b16 %v340, %v339
      %v351 = vpack.c.b16 %v342, %v341
      %v352 = vpack.c.b16 %v344, %v343
      %361 = vmatprep.subr.bf16.mxu0 0
      %362 = vmatpush1.bf16.msra.mxu0 %v345
      %363 = vmatprep.subr.bf16.mxu0 0
      %364 = vmatpush1.bf16.msra.mxu0 %v346
      %365 = vmatprep.subr.bf16.mxu0 0
      %366 = vmatpush1.bf16.msra.mxu0 %v347
      %367 = vmatprep.subr.bf16.mxu0 0
      %368 = vmatpush1.bf16.msra.mxu0 %v348
      %369 = vmatprep.subr.bf16.mxu0 0
      %370 = vmatpush1.bf16.msra.mxu0 %v349
      %371 = vmatprep.subr.bf16.mxu0 0
      %372 = vmatpush1.bf16.msra.mxu0 %v350
      %373 = vmatprep.subr.bf16.mxu0 0
      %374 = vmatpush1.bf16.msra.mxu0 %v351
      %375 = vmatprep.subr.bf16.mxu0 0
      %376 = vmatpush1.bf16.msra.mxu0 %v352
      %377 = vmatprep.subr.bf16.mxu0 0
      %378 = vmatpush1.bf16.msra.mxu0 0
      %379 = vmatprep.subr.bf16.mxu0 0
      %380 = vmatpush1.bf16.msra.mxu0 0
      %381 = vmatprep.subr.bf16.mxu0 0
      %382 = vmatpush1.bf16.msra.mxu0 0
      %383 = vmatprep.subr.bf16.mxu0 0
      %384 = vmatpush1.bf16.msra.mxu0 0
      %385 = vmatprep.subr.bf16.mxu0 0
      %386 = vmatpush1.bf16.msra.mxu0 0
      %387 = vmatprep.subr.bf16.mxu0 0
      %388 = vmatpush1.bf16.msra.mxu0 0
      %389 = vmatprep.subr.bf16.mxu0 0
      %390 = vmatpush1.bf16.msra.mxu0 0
      %391 = vmatprep.subr.bf16.mxu0 0
      %392 = vmatpush1.bf16.msra.mxu0 0
      %393 = vmatprep.mubr.bf16.mxu0 0
      %394 = vmatmul.mubr.bf16.gmra.mrb[0].mxu0 %v297
      %v395 = vpop.f32.mrb[0].mxu0
      %v396 = vadd.f32 0.0, %v395
      %v397 = vpop.f32.mrb[0].mxu0
      %v398 = vpop.f32.mrb[0].mxu0
      %v399 = vadd.f32 0.0, %v398
      %v400 = vpop.f32.mrb[0].mxu0
      %401 = vmatprep.mubr.bf16.mxu0 0
      %402 = vmatmul.mubr.bf16.gmra.mrb[0].mxu0 %v298
      %v403 = vpop.f32.mrb[0].mxu0
      %v404 = vadd.f32 0.0, %v403
      %v405 = vpop.f32.mrb[0].mxu0
      %v406 = vpop.f32.mrb[0].mxu0
      %v407 = vadd.f32 0.0, %v406
      %v408 = vpop.f32.mrb[0].mxu0
      %409 = vmatprep.mubr.bf16.mxu0 0
      %410 = vmatmul.mubr.bf16.gmra.mrb[0].mxu0 %v299
      %v411 = vpop.f32.mrb[0].mxu0
      %v412 = vadd.f32 0.0, %v411
      %v413 = vpop.f32.mrb[0].mxu0
      %v414 = vpop.f32.mrb[0].mxu0
      %v415 = vadd.f32 0.0, %v414
      %v416 = vpop.f32.mrb[0].mxu0
      %417 = vmatprep.mubr.bf16.mxu0 0
      %418 = vmatmul.mubr.bf16.gmra.mrb[0].mxu0 %v300
      %v419 = vpop.f32.mrb[0].mxu0
      %v420 = vadd.f32 0.0, %v419
      %v421 = vpop.f32.mrb[0].mxu0
      %v422 = vpop.f32.mrb[0].mxu0
      %v423 = vadd.f32 0.0, %v422
      %v424 = vpop.f32.mrb[0].mxu0
      %425 = vmatprep.mubr.bf16.mxu0 0
      %426 = vmatmul.mubr.bf16.gmra.mrb[0].mxu0 %v301
      %v427 = vpop.f32.mrb[0].mxu0
      %v428 = vadd.f32 0.0, %v427
      %v429 = vpop.f32.mrb[0].mxu0
      %v430 = vpop.f32.mrb[0].mxu0
      %v431 = vadd.f32 0.0, %v430
      %v432 = vpop.f32.mrb[0].mxu0
      %433 = vmatprep.mubr.bf16.mxu0 0
      %434 = vmatmul.mubr.bf16.gmra.mrb[0].mxu0 %v302
      %v435 = vpop.f32.mrb[0].mxu0
      %v436 = vadd.f32 0.0, %v435
      %v437 = vpop.f32.mrb[0].mxu0
      %v438 = vpop.f32.mrb[0].mxu0
      %v439 = vadd.f32 0.0, %v438
      %v440 = vpop.f32.mrb[0].mxu0
      %441 = vmatprep.mubr.bf16.mxu0 0
      %442 = vmatmul.mubr.bf16.gmra.mrb[0].mxu0 %v303
      %v443 = vpop.f32.mrb[0].mxu0
      %v444 = vadd.f32 0.0, %v443
      %v445 = vpop.f32.mrb[0].mxu0
      %v446 = vpop.f32.mrb[0].mxu0
      %v447 = vadd.f32 0.0, %v446
      %v448 = vpop.f32.mrb[0].mxu0
      %449 = vmatprep.mubr.bf16.mxu0 0
      %450 = vmatmul.mubr.bf16.gmra.mrb[0].mxu0 %v304
      %v451 = vpop.f32.mrb[0].mxu0
      %v452 = vadd.f32 0.0, %v451
      %v453 = vpop.f32.mrb[0].mxu0
      %v454 = vpop.f32.mrb[0].mxu0
      %v455 = vadd.f32 0.0, %v454
      %v456 = vpop.f32.mrb[0].mxu0
      %457 = vdwg.mxu0
      %v458 = vpack.c.bf16 %v399, %v396
      %v459 = vpack.c.bf16 %v407, %v404
      %v460 = vpack.c.bf16 %v415, %v412
      %v461 = vpack.c.bf16 %v423, %v420
      %v462 = vpack.c.bf16 %v431, %v428
      %v463 = vpack.c.bf16 %v439, %v436
      %v464 = vpack.c.bf16 %v447, %v444
      %v465 = vpack.c.bf16 %v455, %v452
      %v466 = vlaneseq
      %v467 = vshrl.u32 %v466, 7
      %v468 = vsub.s32 0, %v467
      %v469 = vrot.slane %v260, %v468
      %v486 = vunpack.c.l.b16 %v161
      %v487 = vunpack.c.l.b16 %v162
      %v488 = vunpack.c.l.b16 %v163
      %v489 = vunpack.c.l.b16 %v164
      %v490 = vunpack.c.l.b16 %v165
      %v491 = vunpack.c.l.b16 %v166
      %v492 = vunpack.c.l.b16 %v167
      %v493 = vunpack.c.l.b16 %v168
      %v494 = vunpack.c.l.b16 %v169
      %v495 = vunpack.c.l.b16 %v170
      %v496 = vunpack.c.l.b16 %v171
      %v497 = vunpack.c.l.b16 %v172
      %v498 = vunpack.c.l.b16 %v173
      %v499 = vunpack.c.l.b16 %v174
      %v500 = vunpack.c.l.b16 %v175
      %v501 = vunpack.c.l.b16 %v176
      %v502 = vpack.c.b16 %v487, %v486
      %v503 = vpack.c.b16 %v489, %v488
      %v504 = vpack.c.b16 %v491, %v490
      %v505 = vpack.c.b16 %v493, %v492
      %v506 = vpack.c.b16 %v495, %v494
      %v507 = vpack.c.b16 %v497, %v496
      %v508 = vpack.c.b16 %v499, %v498
      %v509 = vpack.c.b16 %v501, %v500
      %518 = vmatprep.subr.bf16.mxu0 0
      %519 = vmatpush1.bf16.msra.mxu0 %v458
      %520 = vmatprep.subr.bf16.mxu0 0
      %521 = vmatpush1.bf16.msra.mxu0 %v459
      %522 = vmatprep.subr.bf16.mxu0 0
      %523 = vmatpush1.bf16.msra.mxu0 %v460
      %524 = vmatprep.subr.bf16.mxu0 0
      %525 = vmatpush1.bf16.msra.mxu0 %v461
      %526 = vmatprep.subr.bf16.mxu0 0
      %527 = vmatpush1.bf16.msra.mxu0 %v462
      %528 = vmatprep.subr.bf16.mxu0 0
      %529 = vmatpush1.bf16.msra.mxu0 %v463
      %530 = vmatprep.subr.bf16.mxu0 0
      %531 = vmatpush1.bf16.msra.mxu0 %v464
      %532 = vmatprep.subr.bf16.mxu0 0
      %533 = vmatpush1.bf16.msra.mxu0 %v465
      %534 = vmatprep.subr.bf16.mxu0 0
      %535 = vmatpush1.bf16.msra.mxu0 0
      %536 = vmatprep.subr.bf16.mxu0 0
      %537 = vmatpush1.bf16.msra.mxu0 0
      %538 = vmatprep.subr.bf16.mxu0 0
      %539 = vmatpush1.bf16.msra.mxu0 0
      %540 = vmatprep.subr.bf16.mxu0 0
      %541 = vmatpush1.bf16.msra.mxu0 0
      %542 = vmatprep.subr.bf16.mxu0 0
      %543 = vmatpush1.bf16.msra.mxu0 0
      %544 = vmatprep.subr.bf16.mxu0 0
      %545 = vmatpush1.bf16.msra.mxu0 0
      %546 = vmatprep.subr.bf16.mxu0 0
      %547 = vmatpush1.bf16.msra.mxu0 0
      %548 = vmatprep.subr.bf16.mxu0 0
      %549 = vmatpush1.bf16.msra.mxu0 0
      %550 = vmatprep.mubr.bf16.mxu0 0
      %551 = vmatmul.mubr.bf16.gmra.mrb[0].mxu0 %v502
      %v552 = vpop.f32.mrb[0].mxu0
      %v553 = vadd.f32 %v469, %v552
      %v554 = vpop.f32.mrb[0].mxu0
      %v555 = vpop.f32.mrb[0].mxu0
      %v556 = vadd.f32 %v469, %v555
      %v557 = vpop.f32.mrb[0].mxu0
      %558 = vmatprep.mubr.bf16.mxu0 0
      %559 = vmatmul.mubr.bf16.gmra.mrb[0].mxu0 %v503
      %v560 = vpop.f32.mrb[0].mxu0
      %v561 = vadd.f32 %v469, %v560
      %v562 = vpop.f32.mrb[0].mxu0
      %v563 = vpop.f32.mrb[0].mxu0
      %v564 = vadd.f32 %v469, %v563
      %v565 = vpop.f32.mrb[0].mxu0
      %566 = vmatprep.mubr.bf16.mxu0 0
      %567 = vmatmul.mubr.bf16.gmra.mrb[0].mxu0 %v504
      %v568 = vpop.f32.mrb[0].mxu0
      %v569 = vadd.f32 %v469, %v568
      %v570 = vpop.f32.mrb[0].mxu0
      %v571 = vpop.f32.mrb[0].mxu0
      %v572 = vadd.f32 %v469, %v571
      %v573 = vpop.f32.mrb[0].mxu0
      %574 = vmatprep.mubr.bf16.mxu0 0
      %575 = vmatmul.mubr.bf16.gmra.mrb[0].mxu0 %v505
      %v576 = vpop.f32.mrb[0].mxu0
      %v577 = vadd.f32 %v469, %v576
      %v578 = vpop.f32.mrb[0].mxu0
      %v579 = vpop.f32.mrb[0].mxu0
      %v580 = vadd.f32 %v469, %v579
      %v581 = vpop.f32.mrb[0].mxu0
      %582 = vmatprep.mubr.bf16.mxu0 0
      %583 = vmatmul.mubr.bf16.gmra.mrb[0].mxu0 %v506
      %v584 = vpop.f32.mrb[0].mxu0
      %v585 = vadd.f32 %v469, %v584
      %v586 = vpop.f32.mrb[0].mxu0
      %v587 = vpop.f32.mrb[0].mxu0
      %v588 = vadd.f32 %v469, %v587
      %v589 = vpop.f32.mrb[0].mxu0
      %590 = vmatprep.mubr.bf16.mxu0 0
      %591 = vmatmul.mubr.bf16.gmra.mrb[0].mxu0 %v507
      %v592 = vpop.f32.mrb[0].mxu0
      %v593 = vadd.f32 %v469, %v592
      %v594 = vpop.f32.mrb[0].mxu0
      %v595 = vpop.f32.mrb[0].mxu0
      %v596 = vadd.f32 %v469, %v595
      %v597 = vpop.f32.mrb[0].mxu0
      %598 = vmatprep.mubr.bf16.mxu0 0
      %599 = vmatmul.mubr.bf16.gmra.mrb[0].mxu0 %v508
      %v600 = vpop.f32.mrb[0].mxu0
      %v601 = vadd.f32 %v469, %v600
      %v602 = vpop.f32.mrb[0].mxu0
      %v603 = vpop.f32.mrb[0].mxu0
      %v604 = vadd.f32 %v469, %v603
      %v605 = vpop.f32.mrb[0].mxu0
      %606 = vmatprep.mubr.bf16.mxu0 0
      %607 = vmatmul.mubr.bf16.gmra.mrb[0].mxu0 %v509
      %v608 = vpop.f32.mrb[0].mxu0
      %v609 = vadd.f32 %v469, %v608
      %v610 = vpop.f32.mrb[0].mxu0
      %v611 = vpop.f32.mrb[0].mxu0
      %v612 = vadd.f32 %v469, %v611
      %v613 = vpop.f32.mrb[0].mxu0
      %614 = vdwg.mxu0
      %v615 = vmax.f32 %v553, 0.0
      %v616 = vmax.f32 %v556, 0.0
      %v617 = vmax.f32 %v561, 0.0
      %v618 = vmax.f32 %v564, 0.0
      %v619 = vmax.f32 %v569, 0.0
      %v620 = vmax.f32 %v572, 0.0
      %v621 = vmax.f32 %v577, 0.0
      %v622 = vmax.f32 %v580, 0.0
      %v623 = vmax.f32 %v585, 0.0
      %v624 = vmax.f32 %v588, 0.0
      %v625 = vmax.f32 %v593, 0.0
      %v626 = vmax.f32 %v596, 0.0
      %v627 = vmax.f32 %v601, 0.0
      %v628 = vmax.f32 %v604, 0.0
      %v629 = vmax.f32 %v609, 0.0
      %v630 = vmax.f32 %v612, 0.0
      %v631 = vpack.c.bf16 %v616, %v615
      %v632 = vpack.c.bf16 %v618, %v617
      %v633 = vpack.c.bf16 %v620, %v619
      %v634 = vpack.c.bf16 %v622, %v621
      %v635 = vpack.c.bf16 %v624, %v623
      %v636 = vpack.c.bf16 %v626, %v625
      %v637 = vpack.c.bf16 %v628, %v627
      %v638 = vpack.c.bf16 %v630, %v629
      %v655 = vunpack.c.l.b16 %v195
      %v656 = vunpack.c.l.b16 %v196
      %v657 = vunpack.c.l.b16 %v197
      %v658 = vunpack.c.l.b16 %v198
      %v659 = vunpack.c.l.b16 %v199
      %v660 = vunpack.c.l.b16 %v200
      %v661 = vunpack.c.l.b16 %v201
      %v662 = vunpack.c.l.b16 %v202
      %v663 = vunpack.c.l.b16 %v203
      %v664 = vunpack.c.l.b16 %v204
      %v665 = vunpack.c.l.b16 %v205
      %v666 = vunpack.c.l.b16 %v206
      %v667 = vunpack.c.l.b16 %v207
      %v668 = vunpack.c.l.b16 %v208
      %v669 = vunpack.c.l.b16 %v209
      %v670 = vunpack.c.l.b16 %v210
      %v671 = vpack.c.b16 %v656, %v655
      %v672 = vpack.c.b16 %v658, %v657
      %v673 = vpack.c.b16 %v660, %v659
      %v674 = vpack.c.b16 %v662, %v661
      %v675 = vpack.c.b16 %v664, %v663
      %v676 = vpack.c.b16 %v666, %v665
      %v677 = vpack.c.b16 %v668, %v667
      %v678 = vpack.c.b16 %v670, %v669
      %687 = vmatprep.subr.bf16.mxu0 0
      %688 = vmatpush1.bf16.msra.mxu0 %v671
      %689 = vmatprep.subr.bf16.mxu0 0
      %690 = vmatpush1.bf16.msra.mxu0 %v672
      %691 = vmatprep.subr.bf16.mxu0 0
      %692 = vmatpush1.bf16.msra.mxu0 %v673
      %693 = vmatprep.subr.bf16.mxu0 0
      %694 = vmatpush1.bf16.msra.mxu0 %v674
      %695 = vmatprep.subr.bf16.mxu0 0
      %696 = vmatpush1.bf16.msra.mxu0 %v675
      %697 = vmatprep.subr.bf16.mxu0 0
      %698 = vmatpush1.bf16.msra.mxu0 %v676
      %699 = vmatprep.subr.bf16.mxu0 0
      %700 = vmatpush1.bf16.msra.mxu0 %v677
      %701 = vmatprep.subr.bf16.mxu0 0
      %702 = vmatpush1.bf16.msra.mxu0 %v678
      %703 = vmatprep.subr.bf16.mxu0 0
      %704 = vmatpush1.bf16.msra.mxu0 0
      %705 = vmatprep.subr.bf16.mxu0 0
      %706 = vmatpush1.bf16.msra.mxu0 0
      %707 = vmatprep.subr.bf16.mxu0 0
      %708 = vmatpush1.bf16.msra.mxu0 0
      %709 = vmatprep.subr.bf16.mxu0 0
      %710 = vmatpush1.bf16.msra.mxu0 0
      %711 = vmatprep.subr.bf16.mxu0 0
      %712 = vmatpush1.bf16.msra.mxu0 0
      %713 = vmatprep.subr.bf16.mxu0 0
      %714 = vmatpush1.bf16.msra.mxu0 0
      %715 = vmatprep.subr.bf16.mxu0 0
      %716 = vmatpush1.bf16.msra.mxu0 0
      %717 = vmatprep.subr.bf16.mxu0 0
      %718 = vmatpush1.bf16.msra.mxu0 0
      %719 = vmatprep.mubr.bf16.mxu0 0
      %720 = vmatmul.mubr.bf16.gmra.mrb[0].mxu0 %v631
      %v721 = vpop.f32.mrb[0].mxu0
      %v722 = vadd.f32 0.0, %v721
      %v723 = vpop.f32.mrb[0].mxu0
      %v724 = vpop.f32.mrb[0].mxu0
      %v725 = vadd.f32 0.0, %v724
      %v726 = vpop.f32.mrb[0].mxu0
      %727 = vmatprep.mubr.bf16.mxu0 0
      %728 = vmatmul.mubr.bf16.gmra.mrb[0].mxu0 %v632
      %v729 = vpop.f32.mrb[0].mxu0
      %v730 = vadd.f32 0.0, %v729
      %v731 = vpop.f32.mrb[0].mxu0
      %v732 = vpop.f32.mrb[0].mxu0
      %v733 = vadd.f32 0.0, %v732
      %v734 = vpop.f32.mrb[0].mxu0
      %735 = vmatprep.mubr.bf16.mxu0 0
      %736 = vmatmul.mubr.bf16.gmra.mrb[0].mxu0 %v633
      %v737 = vpop.f32.mrb[0].mxu0
      %v738 = vadd.f32 0.0, %v737
      %v739 = vpop.f32.mrb[0].mxu0
      %v740 = vpop.f32.mrb[0].mxu0
      %v741 = vadd.f32 0.0, %v740
      %v742 = vpop.f32.mrb[0].mxu0
      %743 = vmatprep.mubr.bf16.mxu0 0
      %744 = vmatmul.mubr.bf16.gmra.mrb[0].mxu0 %v634
      %v745 = vpop.f32.mrb[0].mxu0
      %v746 = vadd.f32 0.0, %v745
      %v747 = vpop.f32.mrb[0].mxu0
      %v748 = vpop.f32.mrb[0].mxu0
      %v749 = vadd.f32 0.0, %v748
      %v750 = vpop.f32.mrb[0].mxu0
      %751 = vmatprep.mubr.bf16.mxu0 0
      %752 = vmatmul.mubr.bf16.gmra.mrb[0].mxu0 %v635
      %v753 = vpop.f32.mrb[0].mxu0
      %v754 = vadd.f32 0.0, %v753
      %v755 = vpop.f32.mrb[0].mxu0
      %v756 = vpop.f32.mrb[0].mxu0
      %v757 = vadd.f32 0.0, %v756
      %v758 = vpop.f32.mrb[0].mxu0
      %759 = vmatprep.mubr.bf16.mxu0 0
      %760 = vmatmul.mubr.bf16.gmra.mrb[0].mxu0 %v636
      %v761 = vpop.f32.mrb[0].mxu0
      %v762 = vadd.f32 0.0, %v761
      %v763 = vpop.f32.mrb[0].mxu0
      %v764 = vpop.f32.mrb[0].mxu0
      %v765 = vadd.f32 0.0, %v764
      %v766 = vpop.f32.mrb[0].mxu0
      %767 = vmatprep.mubr.bf16.mxu0 0
      %768 = vmatmul.mubr.bf16.gmra.mrb[0].mxu0 %v637
      %v769 = vpop.f32.mrb[0].mxu0
      %v770 = vadd.f32 0.0, %v769
      %v771 = vpop.f32.mrb[0].mxu0
      %v772 = vpop.f32.mrb[0].mxu0
      %v773 = vadd.f32 0.0, %v772
      %v774 = vpop.f32.mrb[0].mxu0
      %775 = vmatprep.mubr.bf16.mxu0 0
      %776 = vmatmul.mubr.bf16.gmra.mrb[0].mxu0 %v638
      %v777 = vpop.f32.mrb[0].mxu0
      %v778 = vadd.f32 0.0, %v777
      %v779 = vpop.f32.mrb[0].mxu0
      %v780 = vpop.f32.mrb[0].mxu0
      %v781 = vadd.f32 0.0, %v780
      %v782 = vpop.f32.mrb[0].mxu0
      %783 = vdwg.mxu0
      %v784 = vpack.c.bf16 %v725, %v722
      %v785 = vpack.c.bf16 %v733, %v730
      %v786 = vpack.c.bf16 %v741, %v738
      %v787 = vpack.c.bf16 %v749, %v746
      %v788 = vpack.c.bf16 %v757, %v754
      %v789 = vpack.c.bf16 %v765, %v762
      %v790 = vpack.c.bf16 %v773, %v770
      %v791 = vpack.c.bf16 %v781, %v778
      %v792 = vlaneseq
      %v793 = vshrl.u32 %v792, 7
      %v794 = vsub.s32 1, %v793
      %v795 = vrot.slane %v260, %v794
      %v798 = vunpack.c.l.b16 %v177
      %v799 = vunpack.c.l.b16 %v178
      %v800 = vpack.c.b16 %v799, %v798
      %802 = vmatprep.subr.bf16.mxu0 0
      %803 = vmatpush1.bf16.msra.mxu0 %v784
      %804 = vmatprep.subr.bf16.mxu0 0
      %805 = vmatpush1.bf16.msra.mxu0 %v785
      %806 = vmatprep.subr.bf16.mxu0 0
      %807 = vmatpush1.bf16.msra.mxu0 %v786
      %808 = vmatprep.subr.bf16.mxu0 0
      %809 = vmatpush1.bf16.msra.mxu0 %v787
      %810 = vmatprep.subr.bf16.mxu0 0
      %811 = vmatpush1.bf16.msra.mxu0 %v788
      %812 = vmatprep.subr.bf16.mxu0 0
      %813 = vmatpush1.bf16.msra.mxu0 %v789
      %814 = vmatprep.subr.bf16.mxu0 0
      %815 = vmatpush1.bf16.msra.mxu0 %v790
      %816 = vmatprep.subr.bf16.mxu0 0
      %817 = vmatpush1.bf16.msra.mxu0 %v791
      %818 = vmatprep.subr.bf16.mxu0 0
      %819 = vmatpush1.bf16.msra.mxu0 0
      %820 = vmatprep.subr.bf16.mxu0 0
      %821 = vmatpush1.bf16.msra.mxu0 0
      %822 = vmatprep.subr.bf16.mxu0 0
      %823 = vmatpush1.bf16.msra.mxu0 0
      %824 = vmatprep.subr.bf16.mxu0 0
      %825 = vmatpush1.bf16.msra.mxu0 0
      %826 = vmatprep.subr.bf16.mxu0 0
      %827 = vmatpush1.bf16.msra.mxu0 0
      %828 = vmatprep.subr.bf16.mxu0 0
      %829 = vmatpush1.bf16.msra.mxu0 0
      %830 = vmatprep.subr.bf16.mxu0 0
      %831 = vmatpush1.bf16.msra.mxu0 0
      %832 = vmatprep.subr.bf16.mxu0 0
      %833 = vmatpush1.bf16.msra.mxu0 0
      %834 = vmatprep.mubr.bf16.mxu0 0
      %835 = vmatmul.mubr.bf16.gmra.mrb[0].mxu0 %v800
      %v836 = vpop.f32.mrb[0].mxu0
      %v837 = vadd.f32 %v795, %v836
      %v838 = vpop.f32.mrb[0].mxu0
      %v839 = vpop.f32.mrb[0].mxu0
      %v840 = vadd.f32 %v795, %v839
      %v841 = vpop.f32.mrb[0].mxu0
      %842 = vdwg.mxu0
      %v843 = vpack.c.bf16 %v840, %v837
      %v844 = vlaneseq
      %v845 = vshrl.u32 %v844, 7
      %v846 = vsub.s32 2, %v845
      %v847 = vrot.slane %v262, %v846
      %v864 = vunpack.c.l.b16 %v211
      %v865 = vunpack.c.l.b16 %v212
      %v866 = vunpack.c.l.b16 %v213
      %v867 = vunpack.c.l.b16 %v214
      %v868 = vunpack.c.l.b16 %v215
      %v869 = vunpack.c.l.b16 %v216
      %v870 = vunpack.c.l.b16 %v217
      %v871 = vunpack.c.l.b16 %v218
      %v872 = vunpack.c.l.b16 %v219
      %v873 = vunpack.c.l.b16 %v220
      %v874 = vunpack.c.l.b16 %v221
      %v875 = vunpack.c.l.b16 %v222
      %v876 = vunpack.c.l.b16 %v223
      %v877 = vunpack.c.l.b16 %v224
      %v878 = vunpack.c.l.b16 %v225
      %v879 = vunpack.c.l.b16 %v226
      %v880 = vpack.c.b16 %v865, %v864
      %v881 = vpack.c.b16 %v867, %v866
      %v882 = vpack.c.b16 %v869, %v868
      %v883 = vpack.c.b16 %v871, %v870
      %v884 = vpack.c.b16 %v873, %v872
      %v885 = vpack.c.b16 %v875, %v874
      %v886 = vpack.c.b16 %v877, %v876
      %v887 = vpack.c.b16 %v879, %v878
      %896 = vmatprep.subr.bf16.mxu0 0
      %897 = vmatpush1.bf16.msra.mxu0 %v880
      %898 = vmatprep.subr.bf16.mxu0 0
      %899 = vmatpush1.bf16.msra.mxu0 %v881
      %900 = vmatprep.subr.bf16.mxu0 0
      %901 = vmatpush1.bf16.msra.mxu0 %v882
      %902 = vmatprep.subr.bf16.mxu0 0
      %903 = vmatpush1.bf16.msra.mxu0 %v883
      %904 = vmatprep.subr.bf16.mxu0 0
      %905 = vmatpush1.bf16.msra.mxu0 %v884
      %906 = vmatprep.subr.bf16.mxu0 0
      %907 = vmatpush1.bf16.msra.mxu0 %v885
      %908 = vmatprep.subr.bf16.mxu0 0
      %909 = vmatpush1.bf16.msra.mxu0 %v886
      %910 = vmatprep.subr.bf16.mxu0 0
      %911 = vmatpush1.bf16.msra.mxu0 %v887
      %912 = vmatprep.subr.bf16.mxu0 0
      %913 = vmatpush1.bf16.msra.mxu0 0
      %914 = vmatprep.subr.bf16.mxu0 0
      %915 = vmatpush1.bf16.msra.mxu0 0
      %916 = vmatprep.subr.bf16.mxu0 0
      %917 = vmatpush1.bf16.msra.mxu0 0
      %918 = vmatprep.subr.bf16.mxu0 0
      %919 = vmatpush1.bf16.msra.mxu0 0
      %920 = vmatprep.subr.bf16.mxu0 0
      %921 = vmatpush1.bf16.msra.mxu0 0
      %922 = vmatprep.subr.bf16.mxu0 0
      %923 = vmatpush1.bf16.msra.mxu0 0
      %924 = vmatprep.subr.bf16.mxu0 0
      %925 = vmatpush1.bf16.msra.mxu0 0
      %926 = vmatprep.subr.bf16.mxu0 0
      %927 = vmatpush1.bf16.msra.mxu0 0
      %928 = vmatprep.mubr.bf16.mxu0 0
      %929 = vmatmul.mubr.bf16.gmra.mrb[0].mxu0 %v843
      %v930 = vpop.f32.mrb[0].mxu0
      %v931 = vadd.f32 %v847, %v930
      %v932 = vpop.f32.mrb[0].mxu0
      %v933 = vpop.f32.mrb[0].mxu0
      %v934 = vadd.f32 %v847, %v933
      %v935 = vpop.f32.mrb[0].mxu0
      %936 = vdwg.mxu0
      %vm937 = vcmp.gt.f32.partialorder %v931, 0.0
      %vm938 = vcmp.gt.f32.partialorder %v934, 0.0
      %v939 = vmul.f32 %v931, 0.1
      %v940 = vmul.f32 %v934, 0.1
      %v941 = vsel %vm937, %v931, %v939
      %v942 = vsel %vm938, %v934, %v940
      %v943 = vpack.c.bf16 %v942, %v941
      %v944 = vlaneseq
      %v945 = vshrl.u32 %v944, 7
      %v946 = vsub.s32 3, %v945
      %v947 = vrot.slane %v262, %v946
      %v964 = vunpack.c.l.b16 %v227
      %v965 = vunpack.c.l.b16 %v228
      %v966 = vunpack.c.l.b16 %v229
      %v967 = vunpack.c.l.b16 %v230
      %v968 = vunpack.c.l.b16 %v231
      %v969 = vunpack.c.l.b16 %v232
      %v970 = vunpack.c.l.b16 %v233
      %v971 = vunpack.c.l.b16 %v234
      %v972 = vunpack.c.l.b16 %v235
      %v973 = vunpack.c.l.b16 %v236
      %v974 = vunpack.c.l.b16 %v237
      %v975 = vunpack.c.l.b16 %v238
      %v976 = vunpack.c.l.b16 %v239
      %v977 = vunpack.c.l.b16 %v240
      %v978 = vunpack.c.l.b16 %v241
      %v979 = vunpack.c.l.b16 %v242
      %v980 = vpack.c.b16 %v965, %v964
      %v981 = vpack.c.b16 %v967, %v966
      %v982 = vpack.c.b16 %v969, %v968
      %v983 = vpack.c.b16 %v971, %v970
      %v984 = vpack.c.b16 %v973, %v972
      %v985 = vpack.c.b16 %v975, %v974
      %v986 = vpack.c.b16 %v977, %v976
      %v987 = vpack.c.b16 %v979, %v978
      %996 = vmatprep.subr.bf16.mxu0 0
      %997 = vmatpush1.bf16.msra.mxu0 %v980
      %998 = vmatprep.subr.bf16.mxu0 0
      %999 = vmatpush1.bf16.msra.mxu0 %v981
      %1000 = vmatprep.subr.bf16.mxu0 0
      %1001 = vmatpush1.bf16.msra.mxu0 %v982
      %1002 = vmatprep.subr.bf16.mxu0 0
      %1003 = vmatpush1.bf16.msra.mxu0 %v983
      %1004 = vmatprep.subr.bf16.mxu0 0
      %1005 = vmatpush1.bf16.msra.mxu0 %v984
      %1006 = vmatprep.subr.bf16.mxu0 0
      %1007 = vmatpush1.bf16.msra.mxu0 %v985
      %1008 = vmatprep.subr.bf16.mxu0 0
      %1009 = vmatpush1.bf16.msra.mxu0 %v986
      %1010 = vmatprep.subr.bf16.mxu0 0
      %1011 = vmatpush1.bf16.msra.mxu0 %v987
      %1012 = vmatprep.subr.bf16.mxu0 0
      %1013 = vmatpush1.bf16.msra.mxu0 0
      %1014 = vmatprep.subr.bf16.mxu0 0
      %1015 = vmatpush1.bf16.msra.mxu0 0
      %1016 = vmatprep.subr.bf16.mxu0 0
      %1017 = vmatpush1.bf16.msra.mxu0 0
      %1018 = vmatprep.subr.bf16.mxu0 0
      %1019 = vmatpush1.bf16.msra.mxu0 0
      %1020 = vmatprep.subr.bf16.mxu0 0
      %1021 = vmatpush1.bf16.msra.mxu0 0
      %1022 = vmatprep.subr.bf16.mxu0 0
      %1023 = vmatpush1.bf16.msra.mxu0 0
      %1024 = vmatprep.subr.bf16.mxu0 0
      %1025 = vmatpush1.bf16.msra.mxu0 0
      %1026 = vmatprep.subr.bf16.mxu0 0
      %1027 = vmatpush1.bf16.msra.mxu0 0
      %1028 = vmatprep.mubr.bf16.mxu0 0
      %1029 = vmatmul.mubr.bf16.gmra.mrb[0].mxu0 %v943
      %v1030 = vpop.f32.mrb[0].mxu0
      %v1031 = vadd.f32 %v947, %v1030
      %v1032 = vpop.f32.mrb[0].mxu0
      %v1033 = vpop.f32.mrb[0].mxu0
      %v1034 = vadd.f32 %v947, %v1033
      %v1035 = vpop.f32.mrb[0].mxu0
      %1036 = vdwg.mxu0
      %vm1037 = vcmp.gt.f32.partialorder %v1031, 0.0
      %vm1038 = vcmp.gt.f32.partialorder %v1034, 0.0
      %v1039 = vmul.f32 %v1031, 0.1
      %v1040 = vmul.f32 %v1034, 0.1
      %v1041 = vsel %vm1037, %v1031, %v1039
      %v1042 = vsel %vm1038, %v1034, %v1040
      %v1043 = vpack.c.bf16 %v1042, %v1041
      %v1044 = vlaneseq
      %v1045 = vshrl.u32 %v1044, 7
      %v1046 = vsub.s32 4, %v1045
      %v1047 = vrot.slane %v264, %v1046
      %v1064 = vunpack.c.l.b16 %v243
      %v1065 = vunpack.c.l.b16 %v244
      %v1066 = vunpack.c.l.b16 %v245
      %v1067 = vunpack.c.l.b16 %v246
      %v1068 = vunpack.c.l.b16 %v247
      %v1069 = vunpack.c.l.b16 %v248
      %v1070 = vunpack.c.l.b16 %v249
      %v1071 = vunpack.c.l.b16 %v250
      %v1072 = vunpack.c.l.b16 %v251
      %v1073 = vunpack.c.l.b16 %v252
      %v1074 = vunpack.c.l.b16 %v253
      %v1075 = vunpack.c.l.b16 %v254
      %v1076 = vunpack.c.l.b16 %v255
      %v1077 = vunpack.c.l.b16 %v256
      %v1078 = vunpack.c.l.b16 %v257
      %v1079 = vunpack.c.l.b16 %v258
      %v1080 = vpack.c.b16 %v1065, %v1064
      %v1081 = vpack.c.b16 %v1067, %v1066
      %v1082 = vpack.c.b16 %v1069, %v1068
      %v1083 = vpack.c.b16 %v1071, %v1070
      %v1084 = vpack.c.b16 %v1073, %v1072
      %v1085 = vpack.c.b16 %v1075, %v1074
      %v1086 = vpack.c.b16 %v1077, %v1076
      %v1087 = vpack.c.b16 %v1079, %v1078
      %1096 = vmatprep.subr.bf16.mxu0 0
      %1097 = vmatpush1.bf16.msra.mxu0 %v1080
      %1098 = vmatprep.subr.bf16.mxu0 0
      %1099 = vmatpush1.bf16.msra.mxu0 %v1081
      %1100 = vmatprep.subr.bf16.mxu0 0
      %1101 = vmatpush1.bf16.msra.mxu0 %v1082
      %1102 = vmatprep.subr.bf16.mxu0 0
      %1103 = vmatpush1.bf16.msra.mxu0 %v1083
      %1104 = vmatprep.subr.bf16.mxu0 0
      %1105 = vmatpush1.bf16.msra.mxu0 %v1084
      %1106 = vmatprep.subr.bf16.mxu0 0
      %1107 = vmatpush1.bf16.msra.mxu0 %v1085
      %1108 = vmatprep.subr.bf16.mxu0 0
      %1109 = vmatpush1.bf16.msra.mxu0 %v1086
      %1110 = vmatprep.subr.bf16.mxu0 0
      %1111 = vmatpush1.bf16.msra.mxu0 %v1087
      %1112 = vmatprep.subr.bf16.mxu0 0
      %1113 = vmatpush1.bf16.msra.mxu0 0
      %1114 = vmatprep.subr.bf16.mxu0 0
      %1115 = vmatpush1.bf16.msra.mxu0 0
      %1116 = vmatprep.subr.bf16.mxu0 0
      %1117 = vmatpush1.bf16.msra.mxu0 0
      %1118 = vmatprep.subr.bf16.mxu0 0
      %1119 = vmatpush1.bf16.msra.mxu0 0
      %1120 = vmatprep.subr.bf16.mxu0 0
      %1121 = vmatpush1.bf16.msra.mxu0 0
      %1122 = vmatprep.subr.bf16.mxu0 0
      %1123 = vmatpush1.bf16.msra.mxu0 0
      %1124 = vmatprep.subr.bf16.mxu0 0
      %1125 = vmatpush1.bf16.msra.mxu0 0
      %1126 = vmatprep.subr.bf16.mxu0 0
      %1127 = vmatpush1.bf16.msra.mxu0 0
      %1128 = vmatprep.mubr.bf16.mxu0 0
      %1129 = vmatmul.mubr.bf16.gmra.mrb[0].mxu0 %v1043
      %v1130 = vpop.f32.mrb[0].mxu0
      %v1131 = vadd.f32 %v1047, %v1130
      %v1132 = vpop.f32.mrb[0].mxu0
      %v1133 = vpop.f32.mrb[0].mxu0
      %v1134 = vadd.f32 %v1047, %v1133
      %v1135 = vpop.f32.mrb[0].mxu0
      %1136 = vdwg.mxu0
      %v1137 = vxor.u32 %v1131, 2147483648
      %v1138 = vxor.u32 %v1134, 2147483648
      %v1139 = vmul.f32 %v1137, 1.442695
      %v1140 = vpow.pop %v1139
      %v1141 = vmul.f32 %v1138, 1.442695
      %v1142 = vpow.pop %v1141
      %v1143 = vadd.f32 %v1140, 1.0
      %v1144 = vadd.f32 %v1142, 1.0
      %v1145 = vrcp.pop %v1143
      %v1146 = vmul.f32 1.0, %v1145
      %v1147 = vrcp.pop %v1144
      %v1148 = vmul.f32 1.0, %v1147
      %v1149 = vmul.f32 %v1146, 4.0
      %v1150 = vmul.f32 %v1148, 4.0
      %v1151 = vadd.f32 %v1149, -2.0
      %v1152 = vadd.f32 %v1150, -2.0
      %v1153 = vsub.f32 %v1151, %v1131
      %v1154 = vsub.f32 %v1152, %v1134
      %v1155 = vlaneseq
      %v1156 = vshrl.u32 %v1155, 7
      %v1157 = vsub.s32 5, %v1156
      %v1158 = vrot.slane %v264, %v1157
      %v1159 = vmul.f32 %v1158, %v1153
      %v1160 = vmul.f32 %v1158, %v1154
      %v1161 = vadd.f32 %v1131, %v1159
      %v1162 = vadd.f32 %v1134, %v1160
      %1163 = vst [vmem:[%s143] sm:$0xff] %v1161
      %1164 = vst [vmem:[%s143 + $0x8] sm:$0xff] %v1162
      %p1165 = scmp.lt.s32.totalorder %s13, 1
      %s1166 = scalar_select %p1165, %s13, 1
      %s1167 = smul.addr %s1166, 2
      %s1168 = smul.addr %s1167, 8
      %s1169 = scalar_lea.vmem %s2, %s1168
      // Predicated region
      $region29: #{exec_gnn_forward.1} parent=27 // pred_check
        %p1170 = pneg %p78
      $region30: #{exec_gnn_forward.1} parent=27 // pred_check_branch
        %1172 = sbr.rel (%p1170) target = $region32
      $region31: #{exec_gnn_forward.1} parent=27 // pred_region
        _
      $region32: #{exec_gnn_forward.1} parent=27 // pred_fallthru
        _
    $region28: #{exec_gnn_forward.1} parent=5 // pred_fallthru
      _
    %p1173 = scmp.le.s32.totalorder 2, %s8
    // Predicated region
    $region33: #{exec_gnn_forward.1} parent=5 // pred_check
      %p1174 = pneg %p1173
    $region34: #{exec_gnn_forward.1} parent=5 // pred_check_branch
      %1176 = sbr.rel (%p1174) target = $region36
    $region35: #{exec_gnn_forward.1} parent=5 // pred_region
      %s1177 = ssub.s32 %s8, 2
      // Predicated region
      $region37: #{exec_gnn_forward.1} parent=35 // pred_check
        %p1178 = pneg %p84
      $region38: #{exec_gnn_forward.1} parent=35 // pred_check_branch
        %1180 = sbr.rel (%p1178) target = $region40
      $region39: #{exec_gnn_forward.1} parent=35 // pred_region
        %p1181 = scmp.lt.s32.totalorder %s14, 1
        %s1182 = scalar_select %p1181, %s14, 1
        %s1183 = smul.addr %s1182, 2
        %s1184 = smul.addr %s1183, 8
        %s1185 = scalar_lea.vmem %s2, %s1184
      $region40: #{exec_gnn_forward.1} parent=35 // pred_fallthru
        _
    $region36: #{exec_gnn_forward.1} parent=5 // pred_fallthru
      _
  $region6: #{exec_gnn_forward.1} parent=0 // loop_footer
    %s12 = sadd.s32 1, %s8
  $region7: #{exec_gnn_forward.1} parent=0 // loop_footer_branch
    %7 = sbr.rel target = $region3
  $region8: #{exec_gnn_forward.1} parent=0 // loop_exit
    _

</llo_original>
